<compile_context>
chip_gen: v7x
topology: tpu7x:2x2x1
jax: 0.10.0
libtpu: 0.0.40
codegen_flags: <defaults>
</compile_context>

<pallas_src>
import jax
import jax.numpy as jnp
from jax.experimental import pallas as pl
from jax.experimental.pallas import tpu as pltpu


# ----------------------------------------------------------------------------
# Parameter setup ("buffer" from the PyTorch __init__), built once in plain JAX.
# ----------------------------------------------------------------------------
def _build_sinusoid(dim: int, max_len: int = 1024) -> jnp.ndarray:
    """Replicates RotaryPositionalEmbedding.__init__ buffer exactly."""
    half = dim // 2
    inv_freq = 1.0 / (10000.0 ** (jnp.arange(0.0, half, 2.0) / half))   # (half//2,)
    t = jnp.arange(max_len, dtype=jnp.float32)[:, None]                 # (max_len, 1)
    freqs = t * inv_freq[None, :]                                       # (max_len, half//2)
    return jnp.concatenate([jnp.sin(freqs), jnp.cos(freqs)], axis=-1)   # (max_len, half)


# ----------------------------------------------------------------------------
# Per-(offset, seq_len) glue — hoist/cache this outside the hot path.
# Returns ONE stacked table (2, S, D):
#   t[0] = [ sin | sin ]   (p)
#   t[1] = [-cos | cos ]   (q)
# so that  out = x * p + swap_halves(x) * q  reproduces the module's
#   (x1*sin - x2*cos, x1*cos + x2*sin).
# ----------------------------------------------------------------------------
def prepare_rope_tables(sinusoid: jnp.ndarray, offset: int, seq_len: int,
                        d: int, dtype) -> jnp.ndarray:
    half = d // 2
    sl = jax.lax.dynamic_slice_in_dim(sinusoid, offset, seq_len, axis=0)  # (S, d//2)
    sl = jnp.repeat(sl, 2, axis=1)                                        # (S, d)
    sin_part = sl[:, :half]                                               # (S, d//2)
    cos_part = sl[:, half:]                                               # (S, d//2)
    p = jnp.concatenate([sin_part, sin_part], axis=-1)                    # (S, d)
    q = jnp.concatenate([-cos_part, cos_part], axis=-1)                   # (S, d)
    return jnp.stack([p, q], axis=0).astype(dtype)                        # (2, S, d)


# ----------------------------------------------------------------------------
# Kernel body: two full-width FMAs + one lane-concat half-swap; f32 accumulate,
# cast on the final store.
# ----------------------------------------------------------------------------
def _rope_kernel(x_ref, t_ref, o_ref):
    # x_ref: (1, TS, D), t_ref: (2, TS, D), o_ref: (1, TS, D)
    d = x_ref.shape[-1]
    half = d // 2
    x = x_ref[...].astype(jnp.float32)            # (1, TS, D)
    p = t_ref[0].astype(jnp.float32)              # (TS, D)  [ sin | sin ]
    q = t_ref[1].astype(jnp.float32)              # (TS, D)  [-cos | cos ]
    # [x1 | x2] -> [x2 | x1] via static slices + lane concat (no pltpu.roll).
    x_swap = jnp.concatenate([x[..., half:], x[..., :half]], axis=-1)
    o_ref[...] = (x * p + x_swap * q).astype(o_ref.dtype)


def _pick_seq_tile(seq_len: int, d: int, itemsize: int,
                   target_block_bytes: int = 2 * 1024 * 1024) -> int:
    """Multiple-of-8 row tile sized to ~target_block_bytes (safe on v7x's
    64 MiB VMEM with double-buffered x/out/table streams; plenty of headroom
    on v5e/v6e's 128 MiB)."""
    rows = (target_block_bytes // max(d * itemsize, 1)) // 8 * 8
    rows = max(rows, 8)
    return seq_len if rows >= seq_len else int(rows)


def rope_pallas(x: jnp.ndarray, tables: jnp.ndarray, *,
                target_block_bytes: int = 2 * 1024 * 1024,
                donate_x: bool = False) -> jnp.ndarray:
    n, seq_len, d = x.shape
    ts = _pick_seq_tile(seq_len, d, x.dtype.itemsize, target_block_bytes)

    # Grid order (seq_tile, batch): batch is the fastest-varying axis, and the
    # table block index depends only on the seq-tile index, so its DMA is
    # skipped for all but the first batch step of each seq tile.
    grid = (pl.cdiv(seq_len, ts), n)

    extra = {}
    if donate_x:
        extra["input_output_aliases"] = {0: 0}

    return pl.pallas_call(
        _rope_kernel,
        out_shape=jax.ShapeDtypeStruct((n, seq_len, d), x.dtype),
        grid_spec=pltpu.PrefetchScalarGridSpec(
            num_scalar_prefetch=0,
            grid=grid,
            in_specs=[
                pl.BlockSpec((1, ts, d), lambda s, b: (b, s, 0)),   # x tile
                pl.BlockSpec((2, ts, d), lambda s, b: (0, s, 0)),   # stacked [p; q]
            ],
            out_specs=pl.BlockSpec((1, ts, d), lambda s, b: (b, s, 0)),
        ),
        compiler_params=pltpu.CompilerParams(
            dimension_semantics=("parallel", "parallel"),
        ),
        **extra,
    )(x, tables)


def rotary_positional_embedding(x: jnp.ndarray,
                                sinusoid: jnp.ndarray,
                                offset: int = 0) -> jnp.ndarray:
    """Pallas implementation of RotaryPositionalEmbedding.forward.

    x:        (n, seq_len, d)  float32 or bfloat16
    sinusoid: (max_len, d//2)  float32 buffer (from _build_sinusoid)
    """
    n, seq_len, d = x.shape
    # Tables are stored in x.dtype (halves table HBM/VMEM bytes for bf16 x);
    # the kernel upcasts to f32 for the FMAs.
    tables = prepare_rope_tables(sinusoid, offset, seq_len, d, x.dtype)
    # TODO(synk): for production head_dim=64 layouts, apply RoPE on the fused
    # (n, S, H*dh) tensor with per-head tables so the last dim is lane-dense,
    # or fuse this rotation into the QK-projection / attention kernel.
    return rope_pallas(x, tables)


# ----------------------------------------------------------------------------
# Pure-JAX transcription of the PyTorch forward for validation.
# ----------------------------------------------------------------------------
def _reference(x, sinusoid, offset=0):
    n, seq_len, d = x.shape
    sl = sinusoid[offset:offset + seq_len, :]
    sl = jnp.repeat(sl, 2, axis=1)
    sin_part, cos_part = sl[:, : d // 2], sl[:, d // 2:]
    x_sin = x[:, :, : d // 2] * sin_part - x[:, :, d // 2:] * cos_part
    x_cos = x[:, :, : d // 2] * cos_part + x[:, :, d // 2:] * sin_part
    return jnp.concatenate((x_sin, x_cos), axis=-1)


if __name__ == "__main__":
    # Small shapes consistent with the module: batch=2, seq=8, hidden=32.
    n, seq_len, dim = 2, 8, 32
    max_len = 1024
    offset = 0

    key = jax.random.PRNGKey(0)
    x = jax.random.normal(key, (n, seq_len, dim), dtype=jnp.float32)

    sinusoid = _build_sinusoid(dim, max_len)          # deterministic "buffer"

    out = rotary_positional_embedding(x, sinusoid, offset)
    out = jax.block_until_ready(out)

    ref = _reference(x, sinusoid, offset)
    assert out.shape == (n, seq_len, dim)
    assert jnp.allclose(out, ref, atol=1e-5, rtol=1e-5), "mismatch vs reference"

    print("KERNEL_OK")
</pallas_src>

<mosaic_0001>
module attributes {stable_mosaic.version = 11 : i64} {
  func.func @_rope_kernel(%arg0: i32, %arg1: i32, %arg2: memref<1x8x32xf32, #tpu.memory_space<vmem>>, %arg3: memref<2x8x32xf32, #tpu.memory_space<vmem>>, %arg4: memref<1x8x32xf32, #tpu.memory_space<vmem>>) attributes {dimension_semantics = [#tpu.dimension_semantics<parallel>, #tpu.dimension_semantics<parallel>], iteration_bounds = array<i64: 1, 2>, scalar_prefetch = 0 : i64, scratch_operands = 0 : i64, tpu.core_type = #tpu.core_type<tc>, window_params = [{transform_indices = @transform_0, window_bounds = array<i64: 1, 8, 32>}, {transform_indices = @transform_1, window_bounds = array<i64: 2, 8, 32>}, {transform_indices = @transform_2, window_bounds = array<i64: 1, 8, 32>}]} {
    %c0 = arith.constant 0 : index
    %c0_0 = arith.constant 0 : index
    %c0_1 = arith.constant 0 : index
    %0 = vector.load %arg2[%c0, %c0_0, %c0_1] : memref<1x8x32xf32, #tpu.memory_space<vmem>>, vector<1x8x32xf32>
    %c0_2 = arith.constant 0 : index
    %c0_3 = arith.constant 0 : index
    %c0_4 = arith.constant 0 : index
    %1 = vector.load %arg3[%c0_2, %c0_3, %c0_4] : memref<2x8x32xf32, #tpu.memory_space<vmem>>, vector<1x8x32xf32>
    %2 = vector.shape_cast %1 : vector<1x8x32xf32> to vector<8x32xf32>
    %c1 = arith.constant 1 : index
    %c0_5 = arith.constant 0 : index
    %c0_6 = arith.constant 0 : index
    %3 = vector.load %arg3[%c1, %c0_5, %c0_6] : memref<2x8x32xf32, #tpu.memory_space<vmem>>, vector<1x8x32xf32>
    %4 = vector.shape_cast %3 : vector<1x8x32xf32> to vector<8x32xf32>
    %5 = vector.extract_strided_slice %0 {offsets = [0, 0, 16], sizes = [1, 8, 16], strides = [1, 1, 1]} : vector<1x8x32xf32> to vector<1x8x16xf32>
    %6 = vector.extract_strided_slice %0 {offsets = [0, 0, 0], sizes = [1, 8, 16], strides = [1, 1, 1]} : vector<1x8x32xf32> to vector<1x8x16xf32>
    %7 = tpu.concatenate %5, %6 in 2 : vector<1x8x16xf32>, vector<1x8x16xf32> -> vector<1x8x32xf32>
    %8 = vector.shape_cast %2 : vector<8x32xf32> to vector<1x8x32xf32>
    %9 = arith.mulf %0, %8 : vector<1x8x32xf32>
    %10 = vector.shape_cast %4 : vector<8x32xf32> to vector<1x8x32xf32>
    %11 = arith.mulf %7, %10 : vector<1x8x32xf32>
    %12 = arith.addf %9, %11 : vector<1x8x32xf32>
    %c0_7 = arith.constant 0 : index
    %c0_8 = arith.constant 0 : index
    %c0_9 = arith.constant 0 : index
    %13 = vector.load %arg4[%c0_7, %c0_8, %c0_9] : memref<1x8x32xf32, #tpu.memory_space<vmem>>, vector<1x8x32xf32>
    tpu.vector_store %arg4[%c0_7, %c0_8, %c0_9], %12 {strides = array<i32>} : memref<1x8x32xf32, #tpu.memory_space<vmem>>, vector<1x8x32xf32>,
    return
  }
  func.func @transform_0(%arg0: i32, %arg1: i32) -> (i32, i32, i32) {
    %c0_i32 = arith.constant 0 : i32
    %c0_i32_0 = arith.constant 0 : i32
    return %arg1, %arg0, %c0_i32 : i32, i32, i32
  }
  func.func @transform_1(%arg0: i32, %arg1: i32) -> (i32, i32, i32) {
    %c0_i32 = arith.constant 0 : i32
    %c0_i32_0 = arith.constant 0 : i32
    %c0_i32_1 = arith.constant 0 : i32
    return %c0_i32, %arg0, %c0_i32_0 : i32, i32, i32
  }
  func.func @transform_2(%arg0: i32, %arg1: i32) -> (i32, i32, i32) {
    %c0_i32 = arith.constant 0 : i32
    %c0_i32_0 = arith.constant 0 : i32
    return %arg1, %arg0, %c0_i32 : i32, i32, i32
  }
}

</mosaic_0001>

<llo_original>
// kernel: tpu_custom_call.1
$region0: #{tpu_custom_call.1}
  #allocation0 [shape = 'u32[]', space=smem, size = 0x4, offset = 0x4, fixed_abs, tag = 'smem constant byte address 0x4 - core index']
  #allocation1 [shape = 'u32[144,128]{1,0:T(1,128)}', space=vmem, size = 0x12000, scoped, tag = 'internal scratch']
  %s0 = inlined_call_operand.hbm [shape: f32[2,8,32], index: 0, kind: input, shape index: {}]
  %s1 = inlined_call_operand.hbm [shape: f32[2,8,32], index: 1, kind: input, shape index: {}]
  %s2 = inlined_call_operand.hbm [shape: f32[2,8,32], index: 2, kind: output, shape index: {}]
  %s3 = sld [smem:[#allocation0]]
  $region49: #{tpu_custom_call.1} parent=0
    _
  %s5 = ssub.s32 1, %s3
  %s6 = scalar_select 0, %s5, %s3
  $region1: #{tpu_custom_call.1} parent=0
    #allocation2 [shape = 'u8[8192]{0}', space=vmem, size = 0x2000, scoped, tag = 'input window, operand 0']
    #allocation3 [shape = 's32[2]{0}', space=sflag, size = 0x8, scoped, tag = 'scoped memory for tpu_custom_call.1']
    #allocation4 [shape = 's32[2]{0}', space=sflag, size = 0x8, scoped, tag = 'scoped memory for tpu_custom_call.1']
    #allocation5 [shape = 'u8[8192]{0}', space=vmem, size = 0x2000, scoped, tag = 'input window, operand 1, single buffered']
    #allocation6 [shape = 's32[1]{0}', space=sflag, size = 0x4, scoped, tag = 'scoped memory for tpu_custom_call.1']
    #allocation7 [shape = 'u8[8192]{0}', space=vmem, size = 0x2000, scoped, tag = 'output window, operand 0']
    %7 = vsyncpa [#allocation3], 0
    %s8 = scalar_lea.sflag [#allocation3], 1
    %9 = vsyncpa %s8, 0
    %10 = vsyncpa [#allocation6], 0
    %11 = vsyncpa [#allocation4], 0
    %s12 = scalar_lea.sflag [#allocation4], 1
    %13 = vsyncpa %s12, 0
    loop: start=0, step=1, limit=4
    $region2: #{tpu_custom_call.1} parent=1 // loop_pre_header
      _
    $region3: #{tpu_custom_call.1} parent=1 // loop_header
      %s15 = sphi 0, %s19
      %p16 = scmp.ge.s32.totalorder %s15, 4
      %s22 = sphi 0, %s34
      %s23 = sphi 0, %s30
      %s24 = sphi 0, %s22
      %s25 = sphi 0, %s23
      %s26 = sphi 0, %s24
      %s27 = sphi 0, %s25
      %s39 = sphi 0, %s41
      %s42 = sphi 0, %s39
      %s43 = sphi 0, %s42
      %s59 = sphi 0, %s43
      %s65 = sphi 0, %s67
      %s68 = sphi 0, %s65
      %s69 = sphi 0, %s68
      %s85 = sphi 0, %s69
      %s93 = sphi 0, %s95
      %s96 = sphi 0, %s93
      %s97 = sphi 0, %s96
      %s113 = sphi 0, %s97
    $region4: #{tpu_custom_call.1} parent=1 // loop_header_branch
      %18 = sbr.rel (%p16) target = $region8
    $region5: #{tpu_custom_call.1} parent=1 // loop_body
      %s20 = ssub.s32 %s15, 1
      %s21 = ssub.s32 %s15, 2
      %s28 = sadd.s32 1, %s23
      %p29 = scmp.ge.s32.totalorder %s28, 2
      %s30 = scalar_select %p29, 0, %s28
      %s31 = sadd.s32 1, %s22
      %s32 = scalar_select %p29, %s31, %s22
      %p33 = scmp.ge.s32.totalorder %s32, 1
      %s34 = scalar_select %p33, 0, %s32
      %s35 = ssub.s32 %s23, %s30
      %s36 = ssub.s32 %s22, %s34
      %s37 = sor.u32 %s35, %s36
      %p38 = scmp.eq.s32.totalorder %s37, 0
      %s40 = sadd.s32 %s39, 1
      %s41 = scalar_select %p38, %s39, %s40
      %p44 = pneg %p38
      %p45 = scmp.eq.s32.totalorder %s15, 1
      %p46 = por %p44, %p45
      %p47 = scmp.ne.s32.totalorder %s39, %s42
      %p48 = scmp.eq.s32.totalorder %s15, 0
      %p49 = por %p47, %p48
      %p50 = scmp.ne.s32.totalorder %s39, %s42
      %p51 = scmp.eq.s32.totalorder %s20, 1
      %p52 = por %p50, %p51
      %p53 = scmp.ne.s32.totalorder %s42, %s43
      %p54 = scmp.eq.s32.totalorder %s20, 0
      %p55 = por %p53, %p54
      %p56 = scmp.ne.s32.totalorder %s42, %s43
      %p57 = scmp.eq.s32.totalorder %s21, 1
      %p58 = por %p56, %p57
      %p60 = scmp.ne.s32.totalorder %s43, %s59
      %p61 = scmp.eq.s32.totalorder %s21, 0
      %p62 = por %p60, %p61
      %s63 = ssub.s32 %s22, %s34
      %p64 = scmp.eq.s32.totalorder %s63, 0
      %s66 = sadd.s32 %s65, 1
      %s67 = scalar_select %p64, %s65, %s66
      %p70 = pneg %p64
      %p71 = scmp.eq.s32.totalorder %s15, 1
      %p72 = por %p70, %p71
      %p73 = scmp.ne.s32.totalorder %s65, %s68
      %p74 = scmp.eq.s32.totalorder %s15, 0
      %p75 = por %p73, %p74
      %p76 = scmp.ne.s32.totalorder %s65, %s68
      %p77 = scmp.eq.s32.totalorder %s20, 1
      %p78 = por %p76, %p77
      %p79 = scmp.ne.s32.totalorder %s68, %s69
      %p80 = scmp.eq.s32.totalorder %s20, 0
      %p81 = por %p79, %p80
      %p82 = scmp.ne.s32.totalorder %s68, %s69
      %p83 = scmp.eq.s32.totalorder %s21, 1
      %p84 = por %p82, %p83
      %p86 = scmp.ne.s32.totalorder %s69, %s85
      %p87 = scmp.eq.s32.totalorder %s21, 0
      %p88 = por %p86, %p87
      %s89 = ssub.s32 %s23, %s30
      %s90 = ssub.s32 %s22, %s34
      %s91 = sor.u32 %s89, %s90
      %p92 = scmp.eq.s32.totalorder %s91, 0
      %s94 = sadd.s32 %s93, 1
      %s95 = scalar_select %p92, %s93, %s94
      %p98 = pneg %p92
      %p99 = scmp.eq.s32.totalorder %s15, 1
      %p100 = por %p98, %p99
      %p101 = scmp.ne.s32.totalorder %s93, %s96
      %p102 = scmp.eq.s32.totalorder %s15, 0
      %p103 = por %p101, %p102
      %p104 = scmp.ne.s32.totalorder %s93, %s96
      %p105 = scmp.eq.s32.totalorder %s20, 1
      %p106 = por %p104, %p105
      %p107 = scmp.ne.s32.totalorder %s96, %s97
      %p108 = scmp.eq.s32.totalorder %s20, 0
      %p109 = por %p107, %p108
      %p110 = scmp.ne.s32.totalorder %s96, %s97
      %p111 = scmp.eq.s32.totalorder %s21, 1
      %p112 = por %p110, %p111
      %p114 = scmp.ne.s32.totalorder %s97, %s113
      %p115 = scmp.eq.s32.totalorder %s21, 0
      %p116 = por %p114, %p115
      %p117 = scmp.le.s32.totalorder 1, %s15
      %p118 = scmp.lt.s32.totalorder %s15, 3
      %p119 = pnand %p117, %p118
      %p120 = pneg %p119
      // Predicated region
      $region9: #{tpu_custom_call.1} parent=5 // pred_check
        _
      $region10: #{tpu_custom_call.1} parent=5 // pred_check_branch
        %122 = sbr.rel (%p119) target = $region12
      $region11: #{tpu_custom_call.1} parent=5 // pred_region
        %s123 = ssub.s32 %s15, 1
        // Predicated region
        $region13: #{tpu_custom_call.1} parent=11 // pred_check
          %p124 = pneg %p81
        $region14: #{tpu_custom_call.1} parent=11 // pred_check_branch
          %126 = sbr.rel (%p124) target = $region16
        $region15: #{tpu_custom_call.1} parent=11 // pred_region
          %s128 = ssub.s32 256, 256
          %129 = vsyncadd [#allocation6], %s128
          %s130 = smul.addr %s24, 128
          %s131 = scalar_lea.hbm %s1, %s130
          %s132 = sshll.u32 [#allocation5], 4
          %s133 = int_to_ptr.vmem [resolvable:$true] %s132
          %138 = dma.hbm_to_vmem [thread:$0]  %s131, 256, %s133, [#allocation6], 128, 128, 8
        $region16: #{tpu_custom_call.1} parent=11 // pred_fallthru
          _
      $region12: #{tpu_custom_call.1} parent=5 // pred_fallthru
        _
      %p139 = scmp.lt.s32.totalorder %s15, 2
      // Predicated region
      $region17: #{tpu_custom_call.1} parent=5 // pred_check
        %p140 = pneg %p139
      $region18: #{tpu_custom_call.1} parent=5 // pred_check_branch
        %142 = sbr.rel (%p140) target = $region20
      $region19: #{tpu_custom_call.1} parent=5 // pred_region
        // Predicated region
        $region21: #{tpu_custom_call.1} parent=19 // pred_check
          %p143 = pneg %p49
        $region22: #{tpu_custom_call.1} parent=19 // pred_check_branch
          %145 = sbr.rel (%p143) target = $region24
        $region23: #{tpu_custom_call.1} parent=19 // pred_region
          %s146 = sand.u32 %s39, 1
          %s147 = scalar_lea.sflag [#allocation3], %s146
          %s148 = sand.u32 %s39, 1
          %s149 = smul.addr %s148, 8
          %s150 = scalar_lea.vmem [#allocation2], %s149
          %s152 = ssub.s32 128, 128
          %153 = vsyncadd %s147, %s152
          %s154 = sadd.s32 %s22, %s23
          %s155 = smul.addr %s154, 128
          %s156 = scalar_lea.hbm %s0, %s155
          %s158 = sshll.u32 %s150, 4
          %s159 = int_to_ptr.vmem [resolvable:$true] %s158
          %161 = dma.hbm_to_vmem [thread:$0]  %s156, 128, %s159, %s147
        $region24: #{tpu_custom_call.1} parent=19 // pred_fallthru
          _
      $region20: #{tpu_custom_call.1} parent=5 // pred_fallthru
        _
      %p162 = scmp.le.s32.totalorder 1, %s15
      %p163 = scmp.lt.s32.totalorder %s15, 3
      %p164 = pnand %p162, %p163
      %p165 = pneg %p164
      // Predicated region
      $region25: #{tpu_custom_call.1} parent=5 // pred_check
        _
      $region26: #{tpu_custom_call.1} parent=5 // pred_check_branch
        %167 = sbr.rel (%p164) target = $region28
      $region27: #{tpu_custom_call.1} parent=5 // pred_region
        %s168 = ssub.s32 %s15, 1
        %s169 = sand.u32 %s42, 1
        %s170 = scalar_lea.sflag [#allocation3], %s169
        %s171 = sand.u32 %s42, 1
        %s172 = smul.addr %s171, 8
        %s173 = scalar_lea.vmem [#allocation2], %s172
        // Predicated region
        $region29: #{tpu_custom_call.1} parent=27 // pred_check
          %p174 = pneg %p55
        $region30: #{tpu_custom_call.1} parent=27 // pred_check_branch
          %176 = sbr.rel (%p174) target = $region32
        $region31: #{tpu_custom_call.1} parent=27 // pred_region
          %177 = dma.done %s170, 128
        $region32: #{tpu_custom_call.1} parent=27 // pred_fallthru
          _
        // Predicated region
        $region33: #{tpu_custom_call.1} parent=27 // pred_check
          %p178 = pneg %p81
        $region34: #{tpu_custom_call.1} parent=27 // pred_check_branch
          %180 = sbr.rel (%p178) target = $region36
        $region35: #{tpu_custom_call.1} parent=27 // pred_region
          %181 = dma.done [#allocation6], 256
        $region36: #{tpu_custom_call.1} parent=27 // pred_fallthru
          _
        %s182 = sand.u32 %s42, 1
        %s183 = scalar_lea.sflag [#allocation3], %s182
        %s184 = sand.u32 %s42, 1
        %s185 = smul.addr %s184, 8
        %s186 = scalar_lea.vmem [#allocation2], %s185
        %p187 = pneg %p55
        %p188 = pneg %p52
        %p189 = pneg %p81
        %p190 = pneg %p78
        %p191 = pneg %p109
        %p192 = pneg %p106
        %s193 = sand.u32 %s96, 1
        %s194 = scalar_lea.sflag [#allocation4], %s193
        %s195 = sand.u32 %s96, 1
        %s196 = smul.addr %s195, 8
        %s197 = scalar_lea.vmem [#allocation7], %s196
        %v198 = vld [vmem:[%s173] sm:$0xff]
        %v199 = vld [vmem:[#allocation5] sm:$0xff]
        %s200 = scalar_lea.vmem [#allocation5], 8
        %v201 = vld [vmem:[%s200] sm:$0xff]
        %203 = vrot.lane.b32.xlu0 %v198, 112
        %v204 = vpop.permute.xlu0 %203
        %206 = vrot.lane.b32.xlu0 %v198, 16
        %v207 = vpop.permute.xlu0 %206
        %vm209 = vcmask 130048
        %v210 = vsel %vm209, %v204, %v207
        %v211 = vmul.f32 %v198, %v199
        %v212 = vmul.f32 %v210, %v201
        %v213 = vadd.f32 %v211, %v212
        %vm214 = vcmask 261120
        %215 = vst.msk [vmem:[%s197] sm:$0xff] %vm214, %v213
        %s216 = sand.u32 %s96, 1
        %s217 = scalar_lea.sflag [#allocation4], %s216
        %s218 = sand.u32 %s96, 1
        %s219 = smul.addr %s218, 8
        %s220 = scalar_lea.vmem [#allocation7], %s219
        // Predicated region
        $region37: #{tpu_custom_call.1} parent=27 // pred_check
          %p221 = pneg %p106
        $region38: #{tpu_custom_call.1} parent=27 // pred_check_branch
          %223 = sbr.rel (%p221) target = $region40
        $region39: #{tpu_custom_call.1} parent=27 // pred_region
          %s225 = ssub.s32 128, 128
          %226 = vsyncadd %s217, %s225
          %s227 = sadd.s32 %s24, %s25
          %s228 = smul.addr %s227, 128
          %s229 = scalar_lea.hbm %s2, %s228
          %s231 = sshll.u32 %s220, 4
          %s232 = int_to_ptr.vmem [resolvable:$true] %s231
          %234 = dma.vmem_to_hbm [thread:$0]  %s232, 128, %s229, %s217
        $region40: #{tpu_custom_call.1} parent=27 // pred_fallthru
          _
      $region28: #{tpu_custom_call.1} parent=5 // pred_fallthru
        _
      %p235 = scmp.le.s32.totalorder 2, %s15
      // Predicated region
      $region41: #{tpu_custom_call.1} parent=5 // pred_check
        %p236 = pneg %p235
      $region42: #{tpu_custom_call.1} parent=5 // pred_check_branch
        %238 = sbr.rel (%p236) target = $region44
      $region43: #{tpu_custom_call.1} parent=5 // pred_region
        %s239 = ssub.s32 %s15, 2
        // Predicated region
        $region45: #{tpu_custom_call.1} parent=43 // pred_check
          %p240 = pneg %p112
        $region46: #{tpu_custom_call.1} parent=43 // pred_check_branch
          %242 = sbr.rel (%p240) target = $region48
        $region47: #{tpu_custom_call.1} parent=43 // pred_region
          %s243 = sand.u32 %s97, 1
          %s244 = scalar_lea.sflag [#allocation4], %s243
          %s245 = sand.u32 %s97, 1
          %s246 = smul.addr %s245, 8
          %s247 = scalar_lea.vmem [#allocation7], %s246
          %248 = dma.done %s244, 128
        $region48: #{tpu_custom_call.1} parent=43 // pred_fallthru
          _
      $region44: #{tpu_custom_call.1} parent=5 // pred_fallthru
        _
    $region6: #{tpu_custom_call.1} parent=1 // loop_footer
      %s19 = sadd.s32 1, %s15
    $region7: #{tpu_custom_call.1} parent=1 // loop_footer_branch
      %14 = sbr.rel target = $region3
    $region8: #{tpu_custom_call.1} parent=1 // loop_exit
      _
    %249 = vsyncpa [#allocation3], 1
    %s250 = scalar_lea.sflag [#allocation3], 1
    %251 = vsyncpa %s250, 1
    %252 = vsyncpa [#allocation6], 1
    %253 = vsyncpa [#allocation4], 1
    %s254 = scalar_lea.sflag [#allocation4], 1
    %255 = vsyncpa %s254, 1

</llo_original>
